<compile_context>
chip_gen: v6e
topology: v6e:2x2x1
jax: 0.10.0
libtpu: 0.0.40
codegen_flags: <defaults>
</compile_context>

<pallas_src>
import functools
import math

import numpy as np
import jax
import jax.numpy as jnp
from jax.experimental import pallas as pl
from jax.experimental.pallas import tpu as pltpu


# ---- shared-range-reduction sincos constants (f32 Cody-Waite + cephes minimax) ----
_TWO_OVER_PI = 0.6366197723675814
# pi/2 = HI + MID + LO; HI/MID have enough trailing-zero mantissa bits that
# k*HI and k*MID are exact in f32 for |k| < 2**13 (i.e. |theta| up to ~1.2e4).
_PIO2_HI = 1.5703125
_PIO2_MID = 4.837512969970703125e-4
_PIO2_LO = 7.54978995489188e-8


def _timestep_embedding_kernel(x_ref, freq_ref, out_ref, *, half):
    # x_ref:    (TN, 1)       f32   timestep row tile
    # freq_ref: (1, half)     f32   resident frequency table (constant block)
    # out_ref:  (TN, 2*half)  out_dtype
    theta = x_ref[...] * freq_ref[...]                     # (TN, half) f32 (VPU)

    # -- argument reduction, shared by sin and cos: theta = k*(pi/2) + r --
    k = jnp.floor(theta * _TWO_OVER_PI + 0.5)              # nearest integer, f32
    r = ((theta - k * _PIO2_HI) - k * _PIO2_MID) - k * _PIO2_LO
    z = r * r

    # -- minimax polynomials on |r| <= pi/4 (cephes sinf/cosf kernels) --
    s = ((-1.9515295891e-4 * z + 8.3321608736e-3) * z - 1.6666654611e-1) * z * r + r
    c = ((2.443315711809948e-5 * z - 1.388731625493765e-3) * z
         + 4.166664568298827e-2) * z * z - 0.5 * z + 1.0

    # -- quadrant selection from k mod 4 --
    q = jnp.bitwise_and(k.astype(jnp.int32), 3)
    neg_s = -s
    neg_c = -c
    sin_t = jnp.where(q == 0, s, jnp.where(q == 1, c, jnp.where(q == 2, neg_s, neg_c)))
    cos_t = jnp.where(q == 0, c, jnp.where(q == 1, neg_s, jnp.where(q == 2, neg_c, s)))

    # Two static (zero-cost) lane-range stores into the full-width output tile;
    # for production shapes (half % 128 == 0) both are unmasked full-vreg stores.
    out_ref[:, :half] = sin_t.astype(out_ref.dtype)
    out_ref[:, half:] = cos_t.astype(out_ref.dtype)


def _round_up(x: int, m: int) -> int:
    return ((x + m - 1) // m) * m


def _freq_table(time_dim: int, max_period: int) -> np.ndarray:
    """Host-side numpy frequency table; f32 math mirrors the PyTorch module."""
    half = time_dim // 2
    scale = np.float32(math.log(max_period) / (half - 1))
    return np.exp(np.arange(half, dtype=np.float32) * -scale).reshape(1, half)


def _vmem_capacity_bytes() -> int:
    try:
        return int(pltpu.get_tpu_info().vmem_capacity_bytes)
    except Exception:
        return 64 << 20   # conservative (v7x-sized) fallback


def _choose_row_tile(n_rows: int, time_dim: int, out_itemsize: int,
                     vmem_capacity_bytes: int) -> int:
    granule = max(8, 32 // out_itemsize)        # sublane packing: 8 f32 / 16 bf16
    padded_td = _round_up(time_dim, 128)        # lane padding of the VMEM tile
    # ~8 MiB output tile on 128 MiB-VMEM parts (v5e/v6e), ~4 MiB on v7x (64 MiB).
    tile_budget = (8 << 20) if vmem_capacity_bytes >= (96 << 20) else (4 << 20)
    budget_rows = max(granule, tile_budget // (padded_td * out_itemsize))
    tn = min(4096, budget_rows, _round_up(n_rows, granule))
    tn = max(granule, (tn // granule) * granule)
    # v7x megacore: a single-step "parallel" grid would leave one TensorCore idle.
    if n_rows > granule and pl.cdiv(n_rows, tn) < 2:
        tn = max(granule, _round_up(pl.cdiv(n_rows, 2), granule))
    return tn


def timestep_embedding(x, time_dim: int, max_period: int = 10000, out_dtype=None):
    """x: (...,) float timesteps -> (..., time_dim) sin/cos embedding.

    out_dtype=jnp.bfloat16 halves writeback bytes (recommended for large N,
    especially on v5e); the math is always f32, only the store is cast.
    """
    assert time_dim % 2 == 0, "time_dim must be even (sin/cos halves)"
    assert time_dim >= 4, "time_dim must be >= 4 (half - 1 must be nonzero)"

    orig_shape = x.shape
    half = time_dim // 2
    N = max(1, int(math.prod(orig_shape)))
    out_dtype = np.dtype(jnp.float32 if out_dtype is None else out_dtype)
    itemsize = out_dtype.itemsize

    freqs = jnp.asarray(_freq_table(time_dim, max_period))      # (1, half) f32 constant
    x_flat = x.reshape(N, 1).astype(jnp.float32)

    vmem_cap = _vmem_capacity_bytes()
    tn = _choose_row_tile(N, time_dim, itemsize, vmem_cap)
    grid = (pl.cdiv(N, tn),)

    # Explicit scoped-VMEM request: double-buffered I/O + f32 intermediate
    # headroom, in lane-padded bytes (v5e's default scoped limit is only 16 MiB).
    padded_td = _round_up(time_dim, 128)
    padded_half = _round_up(half, 128)
    needed = (2 * tn * padded_td * itemsize      # double-buffered output tile
              + 3 * tn * padded_half * 4         # f32 intermediates headroom
              + 2 * tn * 128 * 4                 # double-buffered (tn, 1) input tile
              + 4 * padded_half * 4              # freqs table
              + (2 << 20))                       # slack
    vmem_limit = None
    if vmem_cap - (4 << 20) >= (32 << 20):
        vmem_limit = int(min(max(needed, 32 << 20), vmem_cap - (4 << 20)))

    out_flat = pl.pallas_call(
        functools.partial(_timestep_embedding_kernel, half=half),
        out_shape=jax.ShapeDtypeStruct((N, time_dim), out_dtype),
        grid=grid,
        in_specs=[
            pl.BlockSpec((tn, 1), lambda i: (i, 0)),       # row tile of timesteps
            pl.BlockSpec((1, half), lambda i: (0, 0)),     # freqs: constant block -> VMEM-resident
        ],
        out_specs=pl.BlockSpec((tn, time_dim), lambda i: (i, 0)),
        compiler_params=pltpu.CompilerParams(
            dimension_semantics=("parallel",),             # row axis sharded across v7x TCs
            vmem_limit_bytes=vmem_limit,
        ),
    )(x_flat, freqs)

    return out_flat.reshape(*orig_shape, time_dim)


def _reference(x, time_dim, max_period=10000):
    """Float64 numpy ground truth; freq table bit-identical to the kernel's."""
    freqs = _freq_table(time_dim, max_period).reshape(-1)                    # f32
    theta = (np.asarray(x, dtype=np.float32)[..., None] * freqs).astype(np.float64)
    return np.concatenate([np.sin(theta), np.cos(theta)], axis=-1)


if __name__ == "__main__":
    TIME_DIM = 32
    key = jax.random.PRNGKey(0)
    k1, k2 = jax.random.split(key)

    # (1) f32 path; diffusion-style timesteps up to 1000.
    x1 = jax.random.uniform(k1, (2, 8), dtype=jnp.float32, minval=0.0, maxval=1000.0)
    out1 = jax.block_until_ready(timestep_embedding(x1, TIME_DIM))
    ref1 = _reference(x1, TIME_DIM)
    assert out1.shape == (2, 8, TIME_DIM)
    assert np.allclose(np.asarray(out1, dtype=np.float64), ref1, atol=1e-5, rtol=1e-5)

    # (2) bf16 output + ragged row count (N % row_tile != 0): exercises the
    #     dtype-aware tiling and Pallas' masked handling of the partial last block.
    x2 = jax.random.uniform(k2, (3, 5), dtype=jnp.float32, minval=0.0, maxval=1000.0)
    out2 = jax.block_until_ready(timestep_embedding(x2, TIME_DIM, out_dtype=jnp.bfloat16))
    ref2 = _reference(x2, TIME_DIM)
    assert out2.dtype == jnp.bfloat16 and out2.shape == (3, 5, TIME_DIM)
    out2_f = np.asarray(out2.astype(jnp.float32), dtype=np.float64)
    assert np.allclose(out2_f, ref2, atol=1e-2, rtol=1e-2)

    print("KERNEL_OK")
</pallas_src>

<mosaic_0001>
module attributes {stable_mosaic.version = 11 : i64} {
  func.func @_timestep_embedding_kernel(%arg0: i32, %arg1: memref<8x1xf32, #tpu.memory_space<vmem>>, %arg2: memref<1x16xf32, #tpu.memory_space<vmem>>, %arg3: memref<8x32xf32, #tpu.memory_space<vmem>>) attributes {dimension_semantics = [#tpu.dimension_semantics<parallel>], iteration_bounds = array<i64: 2>, scalar_prefetch = 0 : i64, scratch_operands = 0 : i64, tpu.core_type = #tpu.core_type<tc>, window_params = [{transform_indices = @transform_0, window_bounds = array<i64: 8, 1>}, {pipeline_mode = #tpu.pipeline_mode<synchronous>, transform_indices = @transform_1, window_bounds = array<i64: 1, 16>}, {transform_indices = @transform_2, window_bounds = array<i64: 8, 32>}]} {
    %c0 = arith.constant 0 : index
    %c0_0 = arith.constant 0 : index
    %0 = vector.load %arg1[%c0, %c0_0] : memref<8x1xf32, #tpu.memory_space<vmem>>, vector<8x1xf32>
    %c0_1 = arith.constant 0 : index
    %c0_2 = arith.constant 0 : index
    %1 = vector.load %arg2[%c0_1, %c0_2] : memref<1x16xf32, #tpu.memory_space<vmem>>, vector<1x16xf32>
    %2 = vector.broadcast %0 : vector<8x1xf32> to vector<8x16xf32>
    %3 = vector.broadcast %1 : vector<1x16xf32> to vector<8x16xf32>
    %4 = arith.mulf %2, %3 : vector<8x16xf32>
    %cst = arith.constant 0.636619746 : f32
    %5 = vector.broadcast %cst : f32 to vector<8x16xf32>
    %6 = arith.mulf %4, %5 : vector<8x16xf32>
    %cst_3 = arith.constant 5.000000e-01 : f32
    %7 = vector.broadcast %cst_3 : f32 to vector<8x16xf32>
    %8 = arith.addf %6, %7 : vector<8x16xf32>
    %9 = math.floor %8 : vector<8x16xf32>
    %cst_4 = arith.constant 1.5703125 : f32
    %10 = vector.broadcast %cst_4 : f32 to vector<8x16xf32>
    %11 = arith.mulf %9, %10 : vector<8x16xf32>
    %12 = arith.subf %4, %11 : vector<8x16xf32>
    %cst_5 = arith.constant 4.83751297E-4 : f32
    %13 = vector.broadcast %cst_5 : f32 to vector<8x16xf32>
    %14 = arith.mulf %9, %13 : vector<8x16xf32>
    %15 = arith.subf %12, %14 : vector<8x16xf32>
    %cst_6 = arith.constant 7.549790e-08 : f32
    %16 = vector.broadcast %cst_6 : f32 to vector<8x16xf32>
    %17 = arith.mulf %9, %16 : vector<8x16xf32>
    %18 = arith.subf %15, %17 : vector<8x16xf32>
    %19 = arith.mulf %18, %18 : vector<8x16xf32>
    %cst_7 = arith.constant -1.95152956E-4 : f32
    %20 = vector.broadcast %cst_7 : f32 to vector<8x16xf32>
    %21 = arith.mulf %20, %19 : vector<8x16xf32>
    %cst_8 = arith.constant 0.00833216123 : f32
    %22 = vector.broadcast %cst_8 : f32 to vector<8x16xf32>
    %23 = arith.addf %21, %22 : vector<8x16xf32>
    %24 = arith.mulf %23, %19 : vector<8x16xf32>
    %cst_9 = arith.constant 0.166666552 : f32
    %25 = vector.broadcast %cst_9 : f32 to vector<8x16xf32>
    %26 = arith.subf %24, %25 : vector<8x16xf32>
    %27 = arith.mulf %26, %19 : vector<8x16xf32>
    %28 = arith.mulf %27, %18 : vector<8x16xf32>
    %29 = arith.addf %28, %18 : vector<8x16xf32>
    %cst_10 = arith.constant 2.44331568E-5 : f32
    %30 = vector.broadcast %cst_10 : f32 to vector<8x16xf32>
    %31 = arith.mulf %30, %19 : vector<8x16xf32>
    %cst_11 = arith.constant 0.00138873165 : f32
    %32 = vector.broadcast %cst_11 : f32 to vector<8x16xf32>
    %33 = arith.subf %31, %32 : vector<8x16xf32>
    %34 = arith.mulf %33, %19 : vector<8x16xf32>
    %cst_12 = arith.constant 0.0416666456 : f32
    %35 = vector.broadcast %cst_12 : f32 to vector<8x16xf32>
    %36 = arith.addf %34, %35 : vector<8x16xf32>
    %37 = arith.mulf %36, %19 : vector<8x16xf32>
    %38 = arith.mulf %37, %19 : vector<8x16xf32>
    %cst_13 = arith.constant 5.000000e-01 : f32
    %39 = vector.broadcast %cst_13 : f32 to vector<8x16xf32>
    %40 = arith.mulf %39, %19 : vector<8x16xf32>
    %41 = arith.subf %38, %40 : vector<8x16xf32>
    %cst_14 = arith.constant 1.000000e+00 : f32
    %42 = vector.broadcast %cst_14 : f32 to vector<8x16xf32>
    %43 = arith.addf %41, %42 : vector<8x16xf32>
    %44 = arith.fptosi %9 : vector<8x16xf32> to vector<8x16xi32>
    %c3_i32 = arith.constant 3 : i32
    %45 = vector.broadcast %c3_i32 : i32 to vector<8x16xi32>
    %46 = arith.andi %44, %45 : vector<8x16xi32>
    %cst_15 = arith.constant 0.000000e+00 : f32
    %47 = vector.broadcast %cst_15 : f32 to vector<8x16xf32>
    %48 = arith.subf %47, %29 : vector<8x16xf32>
    %cst_16 = arith.constant 0.000000e+00 : f32
    %49 = vector.broadcast %cst_16 : f32 to vector<8x16xf32>
    %50 = arith.subf %49, %43 : vector<8x16xf32>
    %c0_i32 = arith.constant 0 : i32
    %51 = vector.broadcast %c0_i32 : i32 to vector<8x16xi32>
    %52 = arith.cmpi eq, %46, %51 : vector<8x16xi32>
    %c1_i32 = arith.constant 1 : i32
    %53 = vector.broadcast %c1_i32 : i32 to vector<8x16xi32>
    %54 = arith.cmpi eq, %46, %53 : vector<8x16xi32>
    %c2_i32 = arith.constant 2 : i32
    %55 = vector.broadcast %c2_i32 : i32 to vector<8x16xi32>
    %56 = arith.cmpi eq, %46, %55 : vector<8x16xi32>
    %57 = arith.select %56, %48, %50 : vector<8x16xi1>, vector<8x16xf32>
    %58 = arith.select %54, %43, %57 : vector<8x16xi1>, vector<8x16xf32>
    %59 = arith.select %52, %29, %58 : vector<8x16xi1>, vector<8x16xf32>
    %c0_i32_17 = arith.constant 0 : i32
    %60 = vector.broadcast %c0_i32_17 : i32 to vector<8x16xi32>
    %61 = arith.cmpi eq, %46, %60 : vector<8x16xi32>
    %c1_i32_18 = arith.constant 1 : i32
    %62 = vector.broadcast %c1_i32_18 : i32 to vector<8x16xi32>
    %63 = arith.cmpi eq, %46, %62 : vector<8x16xi32>
    %c2_i32_19 = arith.constant 2 : i32
    %64 = vector.broadcast %c2_i32_19 : i32 to vector<8x16xi32>
    %65 = arith.cmpi eq, %46, %64 : vector<8x16xi32>
    %66 = arith.select %65, %50, %29 : vector<8x16xi1>, vector<8x16xf32>
    %67 = arith.select %63, %48, %66 : vector<8x16xi1>, vector<8x16xf32>
    %68 = arith.select %61, %43, %67 : vector<8x16xi1>, vector<8x16xf32>
    %c0_20 = arith.constant 0 : index
    %c0_21 = arith.constant 0 : index
    %69 = vector.load %arg3[%c0_20, %c0_21] : memref<8x32xf32, #tpu.memory_space<vmem>>, vector<8x16xf32>
    tpu.vector_store %arg3[%c0_20, %c0_21], %59 {strides = array<i32>} : memref<8x32xf32, #tpu.memory_space<vmem>>, vector<8x16xf32>,
    %c0_22 = arith.constant 0 : index
    %c16 = arith.constant 16 : index
    %70 = vector.load %arg3[%c0_22, %c16] : memref<8x32xf32, #tpu.memory_space<vmem>>, vector<8x16xf32>
    tpu.vector_store %arg3[%c0_22, %c16], %68 {strides = array<i32>} : memref<8x32xf32, #tpu.memory_space<vmem>>, vector<8x16xf32>,
    return
  }
  func.func @transform_0(%arg0: i32) -> (i32, i32) {
    %c0_i32 = arith.constant 0 : i32
    %c0_i32_0 = arith.constant 0 : i32
    return %arg0, %c0_i32 : i32, i32
  }
  func.func @transform_1(%arg0: i32) -> (i32, i32) {
    %c0_i32 = arith.constant 0 : i32
    %c0_i32_0 = arith.constant 0 : i32
    %c0_i32_1 = arith.constant 0 : i32
    return %c0_i32, %c0_i32_0 : i32, i32
  }
  func.func @transform_2(%arg0: i32) -> (i32, i32) {
    %c0_i32 = arith.constant 0 : i32
    %c0_i32_0 = arith.constant 0 : i32
    return %arg0, %c0_i32 : i32, i32
  }
}

</mosaic_0001>

<llo_original>
// kernel: tpu_custom_call.1
$region0: #{tpu_custom_call.1}
  #allocation0 [shape = 'u32[]', space=smem, size = 0x4, offset = 0x4, fixed_abs, tag = 'smem constant byte address 0x4 - core index']
  #allocation1 [shape = 'u32[144,128]{1,0:T(1,128)}', space=vmem, size = 0x12000, scoped, tag = 'internal scratch']
  %s0 = inlined_call_operand.vmem [shape: f32[16,1], index: 0, kind: input, shape index: {}]
  %s1 = inlined_call_operand.vmem [shape: f32[1,16], index: 1, kind: input, shape index: {}]
  %s2 = inlined_call_operand.hbm [shape: f32[16,32], index: 2, kind: output, shape index: {}]
  %s3 = sld [smem:[#allocation0]]
  $region41: #{tpu_custom_call.1} parent=0
    _
  %s5 = ssub.s32 1, %s3
  %s6 = scalar_select 0, %s5, %s3
  $region1: #{tpu_custom_call.1} parent=0
    #allocation2 [shape = 'u8[8192]{0}', space=vmem, size = 0x2000, scoped, tag = 'output window, operand 0']
    #allocation3 [shape = 's32[2]{0}', space=sflag, size = 0x8, scoped, tag = 'scoped memory for tpu_custom_call.1']
    %7 = vsyncpa [#allocation3], 0
    %s8 = scalar_lea.sflag [#allocation3], 1
    %9 = vsyncpa %s8, 0
    loop: start=0, step=1, limit=4
    $region2: #{tpu_custom_call.1} parent=1 // loop_pre_header
      _
    $region3: #{tpu_custom_call.1} parent=1 // loop_header
      %s11 = sphi 0, %s15
      %p12 = scmp.ge.s32.totalorder %s11, 4
      %s21 = sphi 0, %s23
      %s24 = sphi 0, %s21
      %s25 = sphi 0, %s24
      %s41 = sphi 0, %s25
      %s45 = sphi 0, %s45
      %s47 = sphi 0, %s45
      %s48 = sphi 0, %s47
      %s62 = sphi 0, %s48
      %s68 = sphi 0, %s70
      %s71 = sphi 0, %s68
      %s72 = sphi 0, %s71
      %s88 = sphi 0, %s72
    $region4: #{tpu_custom_call.1} parent=1 // loop_header_branch
      %14 = sbr.rel (%p12) target = $region8
    $region5: #{tpu_custom_call.1} parent=1 // loop_body
      %s16 = ssub.s32 %s11, 1
      %s17 = ssub.s32 %s11, 2
      %s18 = sadd.s32 %s11, 1
      %s19 = ssub.s32 %s11, %s18
      %p20 = scmp.eq.s32.totalorder %s19, 0
      %s22 = sadd.s32 %s21, 1
      %s23 = scalar_select %p20, %s21, %s22
      %p26 = pneg %p20
      %p27 = scmp.eq.s32.totalorder %s11, 1
      %p28 = por %p26, %p27
      %p29 = scmp.ne.s32.totalorder %s21, %s24
      %p30 = scmp.eq.s32.totalorder %s11, 0
      %p31 = por %p29, %p30
      %p32 = scmp.ne.s32.totalorder %s21, %s24
      %p33 = scmp.eq.s32.totalorder %s16, 1
      %p34 = por %p32, %p33
      %p35 = scmp.ne.s32.totalorder %s24, %s25
      %p36 = scmp.eq.s32.totalorder %s16, 0
      %p37 = por %p35, %p36
      %p38 = scmp.ne.s32.totalorder %s24, %s25
      %p39 = scmp.eq.s32.totalorder %s17, 1
      %p40 = por %p38, %p39
      %p42 = scmp.ne.s32.totalorder %s25, %s41
      %p43 = scmp.eq.s32.totalorder %s17, 0
      %p44 = por %p42, %p43
      %s46 = sadd.s32 %s45, 1
      %p49 = scmp.eq.s32.totalorder %s11, 1
      %p50 = scmp.ne.s32.totalorder %s45, %s47
      %p51 = scmp.eq.s32.totalorder %s11, 0
      %p52 = por %p50, %p51
      %p53 = scmp.ne.s32.totalorder %s45, %s47
      %p54 = scmp.eq.s32.totalorder %s16, 1
      %p55 = por %p53, %p54
      %p56 = scmp.ne.s32.totalorder %s47, %s48
      %p57 = scmp.eq.s32.totalorder %s16, 0
      %p58 = por %p56, %p57
      %p59 = scmp.ne.s32.totalorder %s47, %s48
      %p60 = scmp.eq.s32.totalorder %s17, 1
      %p61 = por %p59, %p60
      %p63 = scmp.ne.s32.totalorder %s48, %s62
      %p64 = scmp.eq.s32.totalorder %s17, 0
      %p65 = por %p63, %p64
      %s66 = ssub.s32 %s11, %s18
      %p67 = scmp.eq.s32.totalorder %s66, 0
      %s69 = sadd.s32 %s68, 1
      %s70 = scalar_select %p67, %s68, %s69
      %p73 = pneg %p67
      %p74 = scmp.eq.s32.totalorder %s11, 1
      %p75 = por %p73, %p74
      %p76 = scmp.ne.s32.totalorder %s68, %s71
      %p77 = scmp.eq.s32.totalorder %s11, 0
      %p78 = por %p76, %p77
      %p79 = scmp.ne.s32.totalorder %s68, %s71
      %p80 = scmp.eq.s32.totalorder %s16, 1
      %p81 = por %p79, %p80
      %p82 = scmp.ne.s32.totalorder %s71, %s72
      %p83 = scmp.eq.s32.totalorder %s16, 0
      %p84 = por %p82, %p83
      %p85 = scmp.ne.s32.totalorder %s71, %s72
      %p86 = scmp.eq.s32.totalorder %s17, 1
      %p87 = por %p85, %p86
      %p89 = scmp.ne.s32.totalorder %s72, %s88
      %p90 = scmp.eq.s32.totalorder %s17, 0
      %p91 = por %p89, %p90
      %p92 = scmp.le.s32.totalorder 1, %s11
      %p93 = scmp.lt.s32.totalorder %s11, 3
      %p94 = pnand %p92, %p93
      %p95 = pneg %p94
      // Predicated region
      $region9: #{tpu_custom_call.1} parent=5 // pred_check
        _
      $region10: #{tpu_custom_call.1} parent=5 // pred_check_branch
        %97 = sbr.rel (%p94) target = $region12
      $region11: #{tpu_custom_call.1} parent=5 // pred_region
        %s98 = ssub.s32 %s11, 1
        // Predicated region
        $region13: #{tpu_custom_call.1} parent=11 // pred_check
          %p99 = pneg %p58
        $region14: #{tpu_custom_call.1} parent=11 // pred_check_branch
          %101 = sbr.rel (%p99) target = $region16
        $region15: #{tpu_custom_call.1} parent=11 // pred_region
          _
        $region16: #{tpu_custom_call.1} parent=11 // pred_fallthru
          _
      $region12: #{tpu_custom_call.1} parent=5 // pred_fallthru
        _
      %p102 = scmp.lt.s32.totalorder %s11, 2
      // Predicated region
      $region17: #{tpu_custom_call.1} parent=5 // pred_check
        %p103 = pneg %p102
      $region18: #{tpu_custom_call.1} parent=5 // pred_check_branch
        %105 = sbr.rel (%p103) target = $region20
      $region19: #{tpu_custom_call.1} parent=5 // pred_region
        // Predicated region
        $region21: #{tpu_custom_call.1} parent=19 // pred_check
          %p106 = pneg %p31
        $region22: #{tpu_custom_call.1} parent=19 // pred_check_branch
          %108 = sbr.rel (%p106) target = $region24
        $region23: #{tpu_custom_call.1} parent=19 // pred_region
          %p109 = scmp.lt.s32.totalorder %s11, 1
          %s110 = scalar_select %p109, %s11, 1
          %s111 = smul.addr %s110, 8
          %s112 = scalar_lea.vmem %s0, %s111
        $region24: #{tpu_custom_call.1} parent=19 // pred_fallthru
          _
      $region20: #{tpu_custom_call.1} parent=5 // pred_fallthru
        _
      %p113 = scmp.le.s32.totalorder 1, %s11
      %p114 = scmp.lt.s32.totalorder %s11, 3
      %p115 = pnand %p113, %p114
      %p116 = pneg %p115
      // Predicated region
      $region25: #{tpu_custom_call.1} parent=5 // pred_check
        _
      $region26: #{tpu_custom_call.1} parent=5 // pred_check_branch
        %118 = sbr.rel (%p115) target = $region28
      $region27: #{tpu_custom_call.1} parent=5 // pred_region
        %s119 = ssub.s32 %s11, 1
        %p120 = scmp.lt.s32.totalorder %s16, 1
        %s121 = scalar_select %p120, %s16, 1
        %s122 = smul.addr %s121, 8
        %s123 = scalar_lea.vmem %s0, %s122
        %p124 = pneg %p37
        %p125 = pneg %p34
        %p126 = pneg %p58
        %p127 = pneg %p55
        %p128 = pneg %p84
        %p129 = pneg %p81
        %s130 = sand.u32 %s71, 1
        %s131 = scalar_lea.sflag [#allocation3], %s130
        %s132 = sand.u32 %s71, 1
        %s133 = smul.addr %s132, 8
        %s134 = scalar_lea.vmem [#allocation2], %s133
        %p135 = scmp.lt.s32.totalorder %s16, 1
        %s136 = scalar_select %p135, %s16, 1
        %s137 = smul.addr %s136, 8
        %s138 = scalar_lea.vmem %s0, %s137
        %v139 = vld [vmem:[%s138] sm:$0xff]
        %v140 = vld [vmem:[%s1] sm:$0x1]
        %142 = vset.pattern.permute.xlu0 0
        %143 = vperm.xlu0 %142, %v139
        %v144 = vpop.permute.xlu0 %143
        %v147 = vlaneseq
        %v148 = vshrl.u32 %v147, 7
        %v149 = vsub.s32 0, %v148
        %v150 = vrot.slane %v140, %v149
        %v152 = vmul.f32 %v144, %v150
        %v153 = vmul.f32 %v152, 0.63661975
        %v154 = vadd.f32 %v153, 0.5
        %v155 = vfloor.f32 %v154
        %v156 = vmul.f32 %v155, 1.5703125
        %v157 = vsub.f32 %v152, %v156
        %v158 = vmul.f32 %v155, 0.0004837513
        %v159 = vsub.f32 %v157, %v158
        %v160 = vmul.f32 %v155, 7.54979e-08
        %v161 = vsub.f32 %v159, %v160
        %v162 = vmul.f32 %v161, %v161
        %v163 = vmul.f32 %v162, -0.00019515296
        %v164 = vadd.f32 %v163, 0.008332161
        %v165 = vmul.f32 %v164, %v162
        %v166 = vsub.f32 %v165, 0.16666655
        %v167 = vmul.f32 %v166, %v162
        %v168 = vmul.f32 %v167, %v161
        %v169 = vadd.f32 %v168, %v161
        %v170 = vmul.f32 %v162, 2.4433157e-05
        %v171 = vsub.f32 %v170, 0.0013887316
        %v172 = vmul.f32 %v171, %v162
        %v173 = vadd.f32 %v172, 0.041666646
        %v174 = vmul.f32 %v173, %v162
        %v175 = vmul.f32 %v174, %v162
        %v176 = vmul.f32 %v162, 0.5
        %v177 = vsub.f32 %v175, %v176
        %v178 = vadd.f32 %v177, 1.0
        %v179 = vcvt.f32.s32.to.zero.pseudo %v155
        %v180 = vand.u32 %v179, 3
        %v181 = vsub.f32 0.0, %v169
        %v182 = vsub.f32 0.0, %v178
        %vm183 = vcmp.eq.s32.totalorder %v180, 0
        %vm184 = vcmp.eq.s32.totalorder %v180, 1
        %vm185 = vcmp.eq.s32.totalorder %v180, 2
        %v186 = vsel %vm185, %v181, %v182
        %v187 = vsel %vm184, %v178, %v186
        %v188 = vsel %vm183, %v169, %v187
        %v189 = vsel %vm185, %v182, %v169
        %v190 = vsel %vm184, %v181, %v189
        %v191 = vsel %vm183, %v178, %v190
        %vm192 = vcmask 130048
        %193 = vst.msk [vmem:[%s134] sm:$0xff] %vm192, %v188
        %195 = vrot.lane.b32.xlu0 %v191, 16
        %v196 = vpop.permute.xlu0 %195
        %vm198 = vcmask 261248
        %199 = vst.msk [vmem:[%s134] sm:$0xff] %vm198, %v196
        %s200 = sand.u32 %s71, 1
        %s201 = scalar_lea.sflag [#allocation3], %s200
        %s202 = sand.u32 %s71, 1
        %s203 = smul.addr %s202, 8
        %s204 = scalar_lea.vmem [#allocation2], %s203
        // Predicated region
        $region29: #{tpu_custom_call.1} parent=27 // pred_check
          %p205 = pneg %p81
        $region30: #{tpu_custom_call.1} parent=27 // pred_check_branch
          %207 = sbr.rel (%p205) target = $region32
        $region31: #{tpu_custom_call.1} parent=27 // pred_region
          %s209 = ssub.s32 128, 128
          %210 = vsyncadd %s201, %s209
          %s211 = smul.addr %s16, 128
          %s212 = scalar_lea.hbm %s2, %s211
          %s214 = sshll.u32 %s204, 4
          %s215 = int_to_ptr.vmem [resolvable:$true] %s214
          %217 = dma.vmem_to_hbm [thread:$0]  %s215, 128, %s212, %s201
        $region32: #{tpu_custom_call.1} parent=27 // pred_fallthru
          _
      $region28: #{tpu_custom_call.1} parent=5 // pred_fallthru
        _
      %p218 = scmp.le.s32.totalorder 2, %s11
      // Predicated region
      $region33: #{tpu_custom_call.1} parent=5 // pred_check
        %p219 = pneg %p218
      $region34: #{tpu_custom_call.1} parent=5 // pred_check_branch
        %221 = sbr.rel (%p219) target = $region36
      $region35: #{tpu_custom_call.1} parent=5 // pred_region
        %s222 = ssub.s32 %s11, 2
        // Predicated region
        $region37: #{tpu_custom_call.1} parent=35 // pred_check
          %p223 = pneg %p87
        $region38: #{tpu_custom_call.1} parent=35 // pred_check_branch
          %225 = sbr.rel (%p223) target = $region40
        $region39: #{tpu_custom_call.1} parent=35 // pred_region
          %s226 = sand.u32 %s72, 1
          %s227 = scalar_lea.sflag [#allocation3], %s226
          %s228 = sand.u32 %s72, 1
          %s229 = smul.addr %s228, 8
          %s230 = scalar_lea.vmem [#allocation2], %s229
          %231 = dma.done %s227, 128
        $region40: #{tpu_custom_call.1} parent=35 // pred_fallthru
          _
      $region36: #{tpu_custom_call.1} parent=5 // pred_fallthru
        _
    $region6: #{tpu_custom_call.1} parent=1 // loop_footer
      %s15 = sadd.s32 1, %s11
    $region7: #{tpu_custom_call.1} parent=1 // loop_footer_branch
      %10 = sbr.rel target = $region3
    $region8: #{tpu_custom_call.1} parent=1 // loop_exit
      _
    %232 = vsyncpa [#allocation3], 1
    %s233 = scalar_lea.sflag [#allocation3], 1
    %234 = vsyncpa %s233, 1

</llo_original>
